<compile_context>
chip_gen: v7x
topology: tpu7x:2x2x1
jax: 0.10.0
libtpu: 0.0.40
codegen_flags: <defaults>
</compile_context>

<pallas_src>
import functools

import jax
import jax.numpy as jnp
from jax.experimental import pallas as pl
from jax.experimental.pallas import tpu as pltpu


def _round_up(x, m):
    return ((x + m - 1) // m) * m


def _vmem_ceiling_bytes():
    """Per-generation VMEM budget: ~80% of physical, capped at 100 MiB.

    v5e/v6e have 128 MiB of VMEM, v7x has 64 MiB per TensorCore; when the hardware
    query is unavailable fall back to a value that is safe on all of them."""
    try:
        cap = pltpu.get_tpu_info().vmem_capacity_bytes
        if cap:
            return int(min(cap * 8 // 10, 100 * 1024 * 1024))
    except Exception:
        pass
    return 48 * 1024 * 1024


def _choose_dst_tiling(n_dst, target=256):
    """Pick (tile_dst, n_dst_p).

    n_dst_p is a multiple of 128 so a layer's padded output can be fed straight to the
    next layer as its src rows (no re-pad).  Small layers split into exactly two dst
    tiles so both v7x TensorCores get work; large layers use `target`-row tiles (fewer
    re-streams of the h_src K slab, which dominates HBM traffic)."""
    n_dst_p = _round_up(max(n_dst, 1), 128)
    target = max(256, _round_up(target, 256))
    if n_dst_p <= 128:
        tile_dst = 64 if n_dst > 64 else 128
    elif n_dst_p < 2 * target:
        tile_dst = n_dst_p // 2                  # exactly two tiles, no extra padding
    else:
        tile_dst = target if n_dst_p % target == 0 else target // 2
    return tile_dst, n_dst_p


def _choose_k_tiling(rows_needed, target=1024):
    """Pick (tile_k, n_src_p); n_src_p is a multiple of 128 (>= rows_needed)."""
    rows = _round_up(max(rows_needed, 1), 128)
    target = max(128, (target // 128) * 128)
    if rows <= target:
        return rows, rows                        # single K slab
    return target, _round_up(rows, target)


def plan_layer(n_dst, n_src, d_in, d_out, *, src_rows_hint=None,
               tile_dst_target=256, tile_k_target=1024, vmem_ceiling=None):
    """Tile / padding geometry for one SAGEConv('mean') layer.

    The same plan is used by block construction (to pre-pad A) and by the kernel
    wrapper, so the fast path never re-pads anything per forward call."""
    d_in_p = _round_up(d_in, 128)
    d_out_p = _round_up(d_out, 128)
    ceiling = _vmem_ceiling_bytes() if vmem_ceiling is None else vmem_ceiling
    if ceiling >= (80 << 20):                    # v5e/v6e: 128 MiB VMEM -> larger K slabs
        tile_k_target = max(tile_k_target, 2048)

    tile_dst, n_dst_p = _choose_dst_tiling(n_dst, tile_dst_target)
    rows_needed = max(n_src, n_dst_p)            # h_dst rows are read out of the h_src array
    if src_rows_hint is not None and src_rows_hint >= rows_needed:
        rows_needed = src_rows_hint              # reuse the previous layer's row padding
    tile_k, n_src_p = _choose_k_tiling(rows_needed, tile_k_target)

    # Grid-invariant weight blocks: single-buffer once they are big (v7x 64 MiB VMEM).
    w_single_buffer = (d_in_p * d_out_p * 4) > (2 << 20)
    w_bufs = 1 if w_single_buffer else 2

    def est(td, tk):
        # Conservative (4 B/elem) per-buffer VMEM estimate, incl. double buffering.
        return (2 * td * tk * 4                      # A tile
                + 2 * tk * d_in_p * 4                # h_src K slab
                + 2 * td * d_in_p * 4                # h_dst tile
                + 2 * w_bufs * d_in_p * d_out_p * 4  # W_self + W_neigh
                + 2 * d_out_p * 4                    # bias
                + 2 * td * d_out_p * 4               # output tile
                + td * d_in_p * 4                    # f32 neighbor accumulator
                + td * d_out_p * 4)                  # f32 self-term scratch

    # Shrink the K tile first, then the dst tile, until the estimate fits the budget.
    while est(tile_dst, tile_k) + (4 << 20) > ceiling and tile_k > 128:
        tile_k = max(128, (tile_k // 2) // 128 * 128)
        n_src_p = _round_up(rows_needed, tile_k)
    while est(tile_dst, tile_k) + (4 << 20) > ceiling and tile_dst > 8:
        tile_dst = max(8, (tile_dst // 2) // 8 * 8)
        n_dst_p = _round_up(n_dst_p, tile_dst)

    # Never go below the 32 MiB scoped-VMEM default; raise only when actually needed.
    vmem_limit = int(min(ceiling, max(32 << 20, est(tile_dst, tile_k) + (16 << 20))))
    return dict(tile_dst=tile_dst, tile_k=tile_k, n_dst_p=n_dst_p, n_src_p=n_src_p,
                d_in_p=d_in_p, d_out_p=d_out_p,
                w_single_buffer=w_single_buffer, vmem_limit=vmem_limit)


def _sage_layer_kernel(a_ref, hsrc_ref, hdst_ref, wself_ref, wneigh_ref, b_ref,
                       o_ref, acc_ref, self_ref, *, apply_relu):
    """One (dst-tile, K-tile) grid step of a fused SAGEConv('mean') layer.

    grid = (dst tiles [parallel], K tiles over n_src [arbitrary, innermost]).
      k == 0    : zero the f32 neighbor accumulator and compute h_dst @ W_self into its
                  own f32 scratch (spreads the epilogue so the last K step stays short).
      every k   : acc += A_tile @ h_src_tile   (row-normalized A -> mean aggregation).
      k == last : out = self + acc @ W_neigh + bias (+ ReLU), stored in the out dtype.
    """
    k = pl.program_id(1)

    @pl.when(k == 0)
    def _init():
        acc_ref[...] = jnp.zeros_like(acc_ref)
        self_ref[...] = jnp.dot(hdst_ref[...], wself_ref[...],
                                preferred_element_type=jnp.float32)

    acc_ref[...] += jnp.dot(a_ref[...], hsrc_ref[...],
                            preferred_element_type=jnp.float32)

    @pl.when(k == pl.num_programs(1) - 1)
    def _finalize():
        neigh = acc_ref[...].astype(hsrc_ref.dtype)   # back to the MXU operand dtype
        out = (self_ref[...]
               + jnp.dot(neigh, wneigh_ref[...], preferred_element_type=jnp.float32)
               + b_ref[...])                          # bias / ReLU epilogue in f32
        if apply_relu:
            out = jnp.maximum(out, 0.0)
        o_ref[...] = out.astype(o_ref.dtype)


def sage_conv_mean(agg_mat, h_src, w_self_p, w_neigh_p, bias_p, *, geom,
                   n_dst, n_src, apply_relu, out_dtype, compute_dtype=jnp.bfloat16):
    """One fused SAGEConv('mean') layer (aggregate + 2 matmuls + bias [+ relu]).

    agg_mat / h_src may already be padded to `geom` and in `compute_dtype` (preferred:
    the pad/cast below are then skipped, zero extra HBM passes).  Padded A rows/columns
    are zero so padded src rows are inert; padded dst rows produce values that are
    discarded by the caller's final slice.  Returns the padded (n_dst_p, d_out_p) output."""
    g = geom
    cd = jnp.dtype(compute_dtype)
    od = jnp.dtype(out_dtype)
    tile_dst, tile_k = g["tile_dst"], g["tile_k"]
    n_dst_p, n_src_p = g["n_dst_p"], g["n_src_p"]
    d_in_p, d_out_p = g["d_in_p"], g["d_out_p"]
    assert n_src_p >= n_dst_p            # h_dst tiles are read out of the h_src array
    assert agg_mat.shape[0] <= n_dst_p and agg_mat.shape[1] <= n_src_p
    assert h_src.shape[0] <= n_src_p and h_src.shape[1] <= d_in_p
    assert w_self_p.shape == (d_in_p, d_out_p) and w_neigh_p.shape == (d_in_p, d_out_p)
    assert bias_p.shape == (1, d_out_p)

    # Pad / cast only if the caller did not pre-pad (fast path: no extra HBM pass).
    a_p = agg_mat
    if a_p.shape != (n_dst_p, n_src_p):
        a_p = jnp.pad(a_p, ((0, n_dst_p - a_p.shape[0]), (0, n_src_p - a_p.shape[1])))
    if a_p.dtype != cd:
        a_p = a_p.astype(cd)
    h_p = h_src
    if h_p.shape != (n_src_p, d_in_p):
        h_p = jnp.pad(h_p, ((0, n_src_p - h_p.shape[0]), (0, d_in_p - h_p.shape[1])))
    if h_p.dtype != cd:
        h_p = h_p.astype(cd)
    ws = w_self_p if w_self_p.dtype == cd else w_self_p.astype(cd)
    wn = w_neigh_p if w_neigh_p.dtype == cd else w_neigh_p.astype(cd)
    b = bias_p if bias_p.dtype == jnp.float32 else bias_p.astype(jnp.float32)

    n_i, n_k = n_dst_p // tile_dst, n_src_p // tile_k

    cost = pl.CostEstimate(
        flops=int(2 * n_dst_p * n_src_p * d_in_p + 4 * n_dst_p * d_in_p * d_out_p),
        transcendentals=0,
        bytes_accessed=int(
            n_dst_p * n_src_p * cd.itemsize              # A
            + n_i * n_src_p * d_in_p * cd.itemsize       # h_src slab, re-read per dst tile
            + n_dst_p * d_in_p * cd.itemsize             # h_dst rows
            + 2 * d_in_p * d_out_p * cd.itemsize + d_out_p * 4
            + n_dst_p * d_out_p * od.itemsize))

    # Single-buffer the grid-invariant weight blocks only once they are large enough to
    # matter (keeps the small-dim path on the default, well-tested pipeline mode).
    w_kwargs = {"pipeline_mode": pl.Buffered(1)} if g["w_single_buffer"] else {}

    kernel = functools.partial(_sage_layer_kernel, apply_relu=apply_relu)

    out_p = pl.pallas_call(
        kernel,
        out_shape=jax.ShapeDtypeStruct((n_dst_p, d_out_p), od),
        grid_spec=pltpu.PrefetchScalarGridSpec(
            num_scalar_prefetch=0,
            grid=(n_i, n_k),
            in_specs=[
                pl.BlockSpec((tile_dst, tile_k), lambda i, k: (i, k)),    # A tile
                pl.BlockSpec((tile_k, d_in_p), lambda i, k: (k, 0)),      # h_src K slab
                pl.BlockSpec((tile_dst, d_in_p), lambda i, k: (i, 0)),    # h_dst rows (same array as h_src)
                pl.BlockSpec((d_in_p, d_out_p), lambda i, k: (0, 0), **w_kwargs),  # W_self
                pl.BlockSpec((d_in_p, d_out_p), lambda i, k: (0, 0), **w_kwargs),  # W_neigh
                pl.BlockSpec((1, d_out_p), lambda i, k: (0, 0)),          # bias (f32)
            ],
            out_specs=pl.BlockSpec((tile_dst, d_out_p), lambda i, k: (i, 0)),
            scratch_shapes=[pltpu.VMEM((tile_dst, d_in_p), jnp.float32),   # neighbor acc
                            pltpu.VMEM((tile_dst, d_out_p), jnp.float32)], # self term
        ),
        compiler_params=pltpu.CompilerParams(
            dimension_semantics=("parallel", "arbitrary"),
            vmem_limit_bytes=g["vmem_limit"],
        ),
        cost_estimate=cost,
    )(a_p, h_p, h_p, ws, wn, b)
    return out_p


class NPCSAGEPallas:
    """JAX/Pallas port of NPCSAGE (GraphSAGE with 'mean' SAGEConv layers)."""

    def __init__(self, fan_out, in_feats, n_hidden, n_classes, key,
                 tile_dst_target=256, tile_k_target=1024):
        self.fan_out = fan_out
        self.n_layers = len(fan_out)
        self.tile_dst_target = tile_dst_target
        self.tile_k_target = tile_k_target
        if self.n_layers > 1:
            dims = [(in_feats, n_hidden)]
            dims += [(n_hidden, n_hidden)] * (self.n_layers - 2)
            dims += [(n_hidden, n_classes)]
        else:
            dims = [(in_feats, n_classes)]
        self.dims = dims

        self.params = []          # unpadded f32 (reference / export)
        self.params_padded = []   # lane-padded f32 (done once at init, not per forward)
        for (d_in, d_out) in dims:
            key, k1, k2, k3 = jax.random.split(key, 4)
            scale = 1.0 / jnp.sqrt(jnp.float32(d_in))
            w_self = jax.random.normal(k1, (d_in, d_out), jnp.float32) * scale
            w_neigh = jax.random.normal(k2, (d_in, d_out), jnp.float32) * scale
            bias = jax.random.normal(k3, (1, d_out), jnp.float32) * 0.01
            self.params.append((w_self, w_neigh, bias))
            d_in_p, d_out_p = _round_up(d_in, 128), _round_up(d_out, 128)
            self.params_padded.append((
                jnp.pad(w_self, ((0, d_in_p - d_in), (0, d_out_p - d_out))),
                jnp.pad(w_neigh, ((0, d_in_p - d_in), (0, d_out_p - d_out))),
                jnp.pad(bias, ((0, 0), (0, d_out_p - d_out))),
            ))

    def plan(self, block_dims):
        """block_dims: [(n_dst, n_src), ...] per layer.  Per-layer tile/padding geometry;
        also tells block construction how to pre-pad each aggregation matrix."""
        geoms, src_rows = [], None
        for (n_dst, n_src), (d_in, d_out) in zip(block_dims, self.dims):
            g = plan_layer(n_dst, n_src, d_in, d_out, src_rows_hint=src_rows,
                           tile_dst_target=self.tile_dst_target,
                           tile_k_target=self.tile_k_target)
            geoms.append(g)
            src_rows = g["n_dst_p"]       # this layer's padded output feeds the next one
        return geoms

    def __call__(self, blocks, input_feats, inverse_idx, compute_dtype=jnp.bfloat16):
        """blocks: list of (agg_mat, n_dst, n_src).  agg_mat is preferably already padded
        to the planned geometry and in compute_dtype (zero per-forward pad/cast passes);
        raw matrices are also accepted and padded here."""
        geoms = self.plan([(nd, ns) for (_, nd, ns) in blocks])
        n_dst_last = blocks[-1][1]
        n_classes = self.dims[-1][1]

        h = input_feats
        for l, ((a, n_dst, n_src), wb, g) in enumerate(
                zip(blocks, self.params_padded, geoms)):
            last = (l == self.n_layers - 1)
            h = sage_conv_mean(
                a, h, wb[0], wb[1], wb[2], geom=g, n_dst=n_dst, n_src=n_src,
                apply_relu=not last,                              # ReLU fused into the kernel
                out_dtype=jnp.float32 if last else compute_dtype,  # bf16 intermediates
                compute_dtype=compute_dtype)
            if l == 0:
                # fsi.inverse_idx: permute dst rows while keeping the padded layout so the
                # next layer needs no re-pad.  (Fully fusing this gather into layer 1's
                # index_map needs the sparse-gather formulation -- see module TODO.)
                perm = jnp.concatenate(
                    [inverse_idx,
                     jnp.arange(n_dst, h.shape[0], dtype=inverse_idx.dtype)])
                h = h[perm]
                # TODO(synk): NPFeatureShuffle is a cross-rank all-to-all; identity on a
                # single device.
            # self.dropout: inference mode -> identity.
        return h[:n_dst_last, :n_classes]


def build_agg_matrix(key, n_dst, n_src, fan):
    """Dense row-normalized aggregation matrix for a sampled bipartite block (f32)."""
    idx = jax.random.randint(key, (n_dst, fan), 0, n_src)
    return jax.nn.one_hot(idx, n_src, dtype=jnp.float32).sum(axis=1) / float(fan)


def reference_forward(blocks, input_feats, inverse_idx, params, n_layers,
                      compute_dtype=jnp.float32):
    """Pure-JAX reference.  With compute_dtype=bfloat16 it mirrors the kernel's casts
    (bf16 MXU operands, f32 accumulation / epilogue, bf16 intermediate activations)."""
    cd = compute_dtype
    hp = jax.lax.Precision.HIGHEST
    h = input_feats
    for l, (a, (w_s, w_n, b)) in enumerate(zip(blocks, params)):
        n_dst = a.shape[0]
        h_c = h.astype(cd)
        neigh = jnp.dot(a.astype(cd), h_c, precision=hp,
                        preferred_element_type=jnp.float32)
        out = (jnp.dot(h_c[:n_dst], w_s.astype(cd), precision=hp,
                       preferred_element_type=jnp.float32)
               + jnp.dot(neigh.astype(cd), w_n.astype(cd), precision=hp,
                         preferred_element_type=jnp.float32)
               + b.astype(jnp.float32))
        if l != n_layers - 1:
            out = jnp.maximum(out, 0.0)
        h = out
        if l == 0:
            h = h[inverse_idx]
    return h


if __name__ == "__main__":
    key = jax.random.PRNGKey(0)

    # Small synthetic problem: 2 layers, fan_out = [4, 4]
    fan_out = [4, 4]
    input_dim, n_hidden, n_classes = 128, 128, 8
    n_src0, n_dst0 = 200, 100   # block 0: 200 src nodes -> 100 dst nodes
    n_dst1 = 40                 # block 1: 100 src nodes -> 40 seed nodes

    key, kf, kb0, kb1, kp, km = jax.random.split(key, 6)
    input_feats = jax.random.normal(kf, (n_src0, input_dim), jnp.float32)
    agg0 = build_agg_matrix(kb0, n_dst0, n_src0, fan_out[0])   # dense f32, unpadded
    agg1 = build_agg_matrix(kb1, n_dst1, n_dst0, fan_out[1])
    inverse_idx = jax.random.permutation(kp, n_dst0)

    model = NPCSAGEPallas(fan_out, input_dim, n_hidden, n_classes, km)

    # --- block-construction-time padding / casting (not a per-forward HBM pass) -----
    block_dims = [(n_dst0, n_src0), (n_dst1, n_dst0)]
    geoms = model.plan(block_dims)

    def prep_blocks(dtype):
        blocks = []
        for a, (nd, ns), g in zip((agg0, agg1), block_dims, geoms):
            a_p = jnp.pad(a, ((0, g["n_dst_p"] - nd), (0, g["n_src_p"] - ns))).astype(dtype)
            blocks.append((a_p, nd, ns))
        return blocks

    def prep_feats(dtype):
        g0 = geoms[0]
        return jnp.pad(input_feats, ((0, g0["n_src_p"] - n_src0),
                                     (0, g0["d_in_p"] - input_dim))).astype(dtype)

    # 1) f32 MXU operands: must match the pure-f32 (HIGHEST-precision) reference tightly.
    out_f32 = jax.block_until_ready(
        model(prep_blocks(jnp.float32), prep_feats(jnp.float32), inverse_idx,
              compute_dtype=jnp.float32))
    ref_f32 = reference_forward([agg0, agg1], input_feats, inverse_idx,
                                model.params, model.n_layers,
                                compute_dtype=jnp.float32)
    assert out_f32.shape == (n_dst1, n_classes)
    assert jnp.allclose(out_f32, ref_f32, atol=2e-3, rtol=2e-3), (
        float(jnp.max(jnp.abs(out_f32 - ref_f32))))

    # 2) bf16 MXU operands (perf default for v6e/v7x): pre-padded + pre-cast blocks /
    #    feats; accumulation / epilogue stay f32 so numerics are controlled.
    out_bf16 = jax.block_until_ready(
        model(prep_blocks(jnp.bfloat16), prep_feats(jnp.bfloat16), inverse_idx,
              compute_dtype=jnp.bfloat16))
    ref_bf16 = reference_forward([agg0, agg1], input_feats, inverse_idx,
                                 model.params, model.n_layers,
                                 compute_dtype=jnp.bfloat16)
    assert out_bf16.shape == (n_dst1, n_classes)
    assert jnp.allclose(out_bf16, ref_bf16, atol=2e-2, rtol=2e-2), (
        float(jnp.max(jnp.abs(out_bf16 - ref_bf16))))

    print("KERNEL_OK")
</pallas_src>

<mosaic_0001>
module attributes {stable_mosaic.version = 11 : i64} {
  func.func @_sage_layer_kernel(%arg0: i32, %arg1: i32, %arg2: memref<64x256xf32, #tpu.memory_space<vmem>>, %arg3: memref<256x128xf32, #tpu.memory_space<vmem>>, %arg4: memref<64x128xf32, #tpu.memory_space<vmem>>, %arg5: memref<128x128xf32, #tpu.memory_space<vmem>>, %arg6: memref<128x128xf32, #tpu.memory_space<vmem>>, %arg7: memref<1x128xf32, #tpu.memory_space<vmem>>, %arg8: memref<64x128xf32, #tpu.memory_space<vmem>>, %arg9: memref<64x128xf32, #tpu.memory_space<vmem>>, %arg10: memref<64x128xf32, #tpu.memory_space<vmem>>) attributes {dimension_semantics = [#tpu.dimension_semantics<parallel>, #tpu.dimension_semantics<arbitrary>], iteration_bounds = array<i64: 2, 1>, scalar_prefetch = 0 : i64, scratch_operands = 2 : i64, tpu.core_type = #tpu.core_type<tc>, window_params = [{transform_indices = @transform_0, window_bounds = array<i64: 64, 256>}, {transform_indices = @transform_1, window_bounds = array<i64: 256, 128>}, {transform_indices = @transform_2, window_bounds = array<i64: 64, 128>}, {pipeline_mode = #tpu.pipeline_mode<synchronous>, transform_indices = @transform_3, window_bounds = array<i64: 128, 128>}, {pipeline_mode = #tpu.pipeline_mode<synchronous>, transform_indices = @transform_4, window_bounds = array<i64: 128, 128>}, {pipeline_mode = #tpu.pipeline_mode<synchronous>, transform_indices = @transform_5, window_bounds = array<i64: 1, 128>}, {transform_indices = @transform_6, window_bounds = array<i64: 64, 128>}]} {
    %c0_i32 = arith.constant 0 : i32
    %0 = arith.cmpi eq, %arg1, %c0_i32 : i32
    %1 = arith.extui %0 : i1 to i32
    %c0_i32_0 = arith.constant 0 : i32
    %2 = arith.cmpi ne, %1, %c0_i32_0 : i32
    scf.if %2 {
      %cst_10 = arith.constant 0.000000e+00 : f32
      %12 = vector.broadcast %cst_10 : f32 to vector<64x128xf32>
      %c0_11 = arith.constant 0 : index
      %c0_12 = arith.constant 0 : index
      %13 = vector.load %arg9[%c0_11, %c0_12] : memref<64x128xf32, #tpu.memory_space<vmem>>, vector<64x128xf32>
      tpu.vector_store %arg9[%c0_11, %c0_12], %12 {strides = array<i32>} : memref<64x128xf32, #tpu.memory_space<vmem>>, vector<64x128xf32>,
      %c0_13 = arith.constant 0 : index
      %c0_14 = arith.constant 0 : index
      %14 = vector.load %arg4[%c0_13, %c0_14] : memref<64x128xf32, #tpu.memory_space<vmem>>, vector<64x128xf32>
      %c0_15 = arith.constant 0 : index
      %c0_16 = arith.constant 0 : index
      %15 = vector.load %arg5[%c0_15, %c0_16] : memref<128x128xf32, #tpu.memory_space<vmem>>, vector<128x128xf32>
      %cst_17 = arith.constant dense<0.000000e+00> : vector<64x128xf32>
      %16 = tpu.matmul %14, %15, %cst_17 {dimension_numbers = #tpu.dot_dimension_numbers<[1], [0], [0], [1], [0, 0, 1, 1], [], []>} : vector<64x128xf32>, vector<128x128xf32>, vector<64x128xf32> -> vector<64x128xf32>
      %c0_18 = arith.constant 0 : index
      %c0_19 = arith.constant 0 : index
      %17 = vector.load %arg10[%c0_18, %c0_19] : memref<64x128xf32, #tpu.memory_space<vmem>>, vector<64x128xf32>
      tpu.vector_store %arg10[%c0_18, %c0_19], %16 {strides = array<i32>} : memref<64x128xf32, #tpu.memory_space<vmem>>, vector<64x128xf32>,
    } else {
    }
    %c0 = arith.constant 0 : index
    %c0_1 = arith.constant 0 : index
    %3 = vector.load %arg9[%c0, %c0_1] : memref<64x128xf32, #tpu.memory_space<vmem>>, vector<64x128xf32>
    %c0_2 = arith.constant 0 : index
    %c0_3 = arith.constant 0 : index
    %4 = vector.load %arg2[%c0_2, %c0_3] : memref<64x256xf32, #tpu.memory_space<vmem>>, vector<64x256xf32>
    %c0_4 = arith.constant 0 : index
    %c0_5 = arith.constant 0 : index
    %5 = vector.load %arg3[%c0_4, %c0_5] : memref<256x128xf32, #tpu.memory_space<vmem>>, vector<256x128xf32>
    %cst = arith.constant dense<0.000000e+00> : vector<64x128xf32>
    %6 = tpu.matmul %4, %5, %cst {dimension_numbers = #tpu.dot_dimension_numbers<[1], [0], [0], [1], [0, 0, 1, 1], [], []>} : vector<64x256xf32>, vector<256x128xf32>, vector<64x128xf32> -> vector<64x128xf32>
    %7 = arith.addf %3, %6 : vector<64x128xf32>
    %c0_6 = arith.constant 0 : index
    %c0_7 = arith.constant 0 : index
    %8 = vector.load %arg9[%c0_6, %c0_7] : memref<64x128xf32, #tpu.memory_space<vmem>>, vector<64x128xf32>
    tpu.vector_store %arg9[%c0_6, %c0_7], %7 {strides = array<i32>} : memref<64x128xf32, #tpu.memory_space<vmem>>, vector<64x128xf32>,
    %c0_i32_8 = arith.constant 0 : i32
    %9 = arith.cmpi eq, %arg1, %c0_i32_8 : i32
    %10 = arith.extui %9 : i1 to i32
    %c0_i32_9 = arith.constant 0 : i32
    %11 = arith.cmpi ne, %10, %c0_i32_9 : i32
    scf.if %11 {
      %c0_10 = arith.constant 0 : index
      %c0_11 = arith.constant 0 : index
      %12 = vector.load %arg9[%c0_10, %c0_11] : memref<64x128xf32, #tpu.memory_space<vmem>>, vector<64x128xf32>
      %c0_12 = arith.constant 0 : index
      %c0_13 = arith.constant 0 : index
      %13 = vector.load %arg10[%c0_12, %c0_13] : memref<64x128xf32, #tpu.memory_space<vmem>>, vector<64x128xf32>
      %c0_14 = arith.constant 0 : index
      %c0_15 = arith.constant 0 : index
      %14 = vector.load %arg6[%c0_14, %c0_15] : memref<128x128xf32, #tpu.memory_space<vmem>>, vector<128x128xf32>
      %cst_16 = arith.constant dense<0.000000e+00> : vector<64x128xf32>
      %15 = tpu.matmul %12, %14, %cst_16 {dimension_numbers = #tpu.dot_dimension_numbers<[1], [0], [0], [1], [0, 0, 1, 1], [], []>} : vector<64x128xf32>, vector<128x128xf32>, vector<64x128xf32> -> vector<64x128xf32>
      %16 = arith.addf %13, %15 : vector<64x128xf32>
      %c0_17 = arith.constant 0 : index
      %c0_18 = arith.constant 0 : index
      %17 = vector.load %arg7[%c0_17, %c0_18] : memref<1x128xf32, #tpu.memory_space<vmem>>, vector<1x128xf32>
      %18 = vector.broadcast %17 : vector<1x128xf32> to vector<64x128xf32>
      %19 = arith.addf %16, %18 : vector<64x128xf32>
      %cst_19 = arith.constant 0.000000e+00 : f32
      %20 = vector.broadcast %cst_19 : f32 to vector<64x128xf32>
      %21 = arith.maximumf %19, %20 : vector<64x128xf32>
      %c0_20 = arith.constant 0 : index
      %c0_21 = arith.constant 0 : index
      %22 = vector.load %arg8[%c0_20, %c0_21] : memref<64x128xf32, #tpu.memory_space<vmem>>, vector<64x128xf32>
      tpu.vector_store %arg8[%c0_20, %c0_21], %21 {strides = array<i32>} : memref<64x128xf32, #tpu.memory_space<vmem>>, vector<64x128xf32>,
    } else {
    }
    return
  }
  func.func @transform_0(%arg0: i32, %arg1: i32) -> (i32, i32) {
    %c0_i32 = arith.constant 0 : i32
    return %arg0, %arg1 : i32, i32
  }
  func.func @transform_1(%arg0: i32, %arg1: i32) -> (i32, i32) {
    %c0_i32 = arith.constant 0 : i32
    %c0_i32_0 = arith.constant 0 : i32
    return %arg1, %c0_i32 : i32, i32
  }
  func.func @transform_2(%arg0: i32, %arg1: i32) -> (i32, i32) {
    %c0_i32 = arith.constant 0 : i32
    %c0_i32_0 = arith.constant 0 : i32
    return %arg0, %c0_i32 : i32, i32
  }
  func.func @transform_3(%arg0: i32, %arg1: i32) -> (i32, i32) {
    %c0_i32 = arith.constant 0 : i32
    %c0_i32_0 = arith.constant 0 : i32
    %c0_i32_1 = arith.constant 0 : i32
    return %c0_i32, %c0_i32_0 : i32, i32
  }
  func.func @transform_4(%arg0: i32, %arg1: i32) -> (i32, i32) {
    %c0_i32 = arith.constant 0 : i32
    %c0_i32_0 = arith.constant 0 : i32
    %c0_i32_1 = arith.constant 0 : i32
    return %c0_i32, %c0_i32_0 : i32, i32
  }
  func.func @transform_5(%arg0: i32, %arg1: i32) -> (i32, i32) {
    %c0_i32 = arith.constant 0 : i32
    %c0_i32_0 = arith.constant 0 : i32
    %c0_i32_1 = arith.constant 0 : i32
    return %c0_i32, %c0_i32_0 : i32, i32
  }
  func.func @transform_6(%arg0: i32, %arg1: i32) -> (i32, i32) {
    %c0_i32 = arith.constant 0 : i32
    %c0_i32_0 = arith.constant 0 : i32
    return %arg0, %c0_i32 : i32, i32
  }
}

</mosaic_0001>

<llo_original>
// kernel: tpu_custom_call.1
$region0: #{tpu_custom_call.1}
  #allocation0 [shape = 'u32[]', space=smem, size = 0x4, offset = 0x4, fixed_abs, tag = 'smem constant byte address 0x4 - core index']
  #allocation1 [shape = 'u32[144,128]{1,0:T(1,128)}', space=vmem, size = 0x12000, scoped, tag = 'internal scratch']
  #allocation2 [shape = 'f32[64,128]{1,0:T(8,128)}', space=vmem, size = 0x8000, scoped, tag = 'scratch operand']
  #allocation3 [shape = 'f32[64,128]{1,0:T(8,128)}', space=vmem, size = 0x8000, scoped, tag = 'scratch operand']
  %s0 = inlined_call_operand.hbm [shape: f32[128,256], index: 0, kind: input, shape index: {}]
  %s1 = inlined_call_operand.hbm [shape: f32[256,128], index: 1, kind: input, shape index: {}]
  %s2 = inlined_call_operand.hbm [shape: f32[256,128], index: 2, kind: input, shape index: {}]
  %s3 = inlined_call_operand.hbm [shape: f32[128,128], index: 3, kind: input, shape index: {}]
  %s4 = inlined_call_operand.hbm [shape: f32[128,128], index: 4, kind: input, shape index: {}]
  %s5 = inlined_call_operand.vmem [shape: f32[1,128], index: 5, kind: input, shape index: {}]
  %s6 = inlined_call_operand.hbm [shape: f32[128,128], index: 6, kind: output, shape index: {}]
  %s7 = sld [smem:[#allocation0]]
  $region85: #{tpu_custom_call.1} parent=0
    _
  %s9 = ssub.s32 1, %s7
  %s10 = scalar_select 0, %s9, %s7
  $region1: #{tpu_custom_call.1} parent=0
    #allocation4 [shape = 'u8[131072]{0}', space=vmem, size = 0x20000, scoped, tag = 'input window, operand 0']
    #allocation5 [shape = 's32[2]{0}', space=sflag, size = 0x8, scoped, tag = 'scoped memory for tpu_custom_call.1']
    #allocation6 [shape = 's32[2]{0}', space=sflag, size = 0x8, scoped, tag = 'scoped memory for tpu_custom_call.1']
    #allocation7 [shape = 'u8[131072]{0}', space=vmem, size = 0x20000, scoped, tag = 'input window, operand 1, single buffered']
    #allocation8 [shape = 's32[1]{0}', space=sflag, size = 0x4, scoped, tag = 'scoped memory for tpu_custom_call.1']
    #allocation9 [shape = 'u8[65536]{0}', space=vmem, size = 0x10000, scoped, tag = 'input window, operand 2']
    #allocation10 [shape = 'u8[65536]{0}', space=vmem, size = 0x10000, scoped, tag = 'input window, operand 3, single buffered']
    #allocation11 [shape = 'u8[65536]{0}', space=vmem, size = 0x10000, scoped, tag = 'input window, operand 4, single buffered']
    #allocation12 [shape = 's32[1]{0}', space=sflag, size = 0x4, scoped, tag = 'scoped memory for tpu_custom_call.1']
    #allocation13 [shape = 'u8[65536]{0}', space=vmem, size = 0x10000, scoped, tag = 'output window, operand 0']
    %11 = vsyncpa [#allocation5], 0
    %s12 = scalar_lea.sflag [#allocation5], 1
    %13 = vsyncpa %s12, 0
    %14 = vsyncpa [#allocation8], 0
    %15 = vsyncpa [#allocation12], 0
    %16 = vsyncpa [#allocation6], 0
    %s17 = scalar_lea.sflag [#allocation6], 1
    %18 = vsyncpa %s17, 0
    loop: start=0, step=1, limit=4
    $region2: #{tpu_custom_call.1} parent=1 // loop_pre_header
      _
    $region3: #{tpu_custom_call.1} parent=1 // loop_header
      %s20 = sphi 0, %s24
      %p21 = scmp.ge.s32.totalorder %s20, 4
      %s27 = sphi 0, %s39
      %s28 = sphi 0, %s35
      %s29 = sphi 0, %s27
      %s30 = sphi 0, %s28
      %s31 = sphi 0, %s29
      %s32 = sphi 0, %s30
      %s44 = sphi 0, %s46
      %s47 = sphi 0, %s44
      %s48 = sphi 0, %s47
      %s64 = sphi 0, %s48
      %s70 = sphi 0, %s72
      %s73 = sphi 0, %s70
      %s74 = sphi 0, %s73
      %s90 = sphi 0, %s74
      %s96 = sphi 0, %s98
      %s99 = sphi 0, %s96
      %s100 = sphi 0, %s99
      %s116 = sphi 0, %s100
      %s120 = sphi 0, %s120
      %s122 = sphi 0, %s120
      %s123 = sphi 0, %s122
      %s137 = sphi 0, %s123
      %s141 = sphi 0, %s141
      %s143 = sphi 0, %s141
      %s144 = sphi 0, %s143
      %s158 = sphi 0, %s144
      %s162 = sphi 0, %s162
      %s164 = sphi 0, %s162
      %s165 = sphi 0, %s164
      %s179 = sphi 0, %s165
      %s185 = sphi 0, %s187
      %s188 = sphi 0, %s185
      %s189 = sphi 0, %s188
      %s205 = sphi 0, %s189
    $region4: #{tpu_custom_call.1} parent=1 // loop_header_branch
      %23 = sbr.rel (%p21) target = $region8
    $region5: #{tpu_custom_call.1} parent=1 // loop_body
      %s25 = ssub.s32 %s20, 1
      %s26 = ssub.s32 %s20, 2
      %s33 = sadd.s32 1, %s28
      %p34 = scmp.ge.s32.totalorder %s33, 1
      %s35 = scalar_select %p34, 0, %s33
      %s36 = sadd.s32 1, %s27
      %s37 = scalar_select %p34, %s36, %s27
      %p38 = scmp.ge.s32.totalorder %s37, 2
      %s39 = scalar_select %p38, 0, %s37
      %s40 = ssub.s32 %s27, %s39
      %s41 = ssub.s32 %s28, %s35
      %s42 = sor.u32 %s40, %s41
      %p43 = scmp.eq.s32.totalorder %s42, 0
      %s45 = sadd.s32 %s44, 1
      %s46 = scalar_select %p43, %s44, %s45
      %p49 = pneg %p43
      %p50 = scmp.eq.s32.totalorder %s20, 1
      %p51 = por %p49, %p50
      %p52 = scmp.ne.s32.totalorder %s44, %s47
      %p53 = scmp.eq.s32.totalorder %s20, 0
      %p54 = por %p52, %p53
      %p55 = scmp.ne.s32.totalorder %s44, %s47
      %p56 = scmp.eq.s32.totalorder %s25, 1
      %p57 = por %p55, %p56
      %p58 = scmp.ne.s32.totalorder %s47, %s48
      %p59 = scmp.eq.s32.totalorder %s25, 0
      %p60 = por %p58, %p59
      %p61 = scmp.ne.s32.totalorder %s47, %s48
      %p62 = scmp.eq.s32.totalorder %s26, 1
      %p63 = por %p61, %p62
      %p65 = scmp.ne.s32.totalorder %s48, %s64
      %p66 = scmp.eq.s32.totalorder %s26, 0
      %p67 = por %p65, %p66
      %s68 = ssub.s32 %s28, %s35
      %p69 = scmp.eq.s32.totalorder %s68, 0
      %s71 = sadd.s32 %s70, 1
      %s72 = scalar_select %p69, %s70, %s71
      %p75 = pneg %p69
      %p76 = scmp.eq.s32.totalorder %s20, 1
      %p77 = por %p75, %p76
      %p78 = scmp.ne.s32.totalorder %s70, %s73
      %p79 = scmp.eq.s32.totalorder %s20, 0
      %p80 = por %p78, %p79
      %p81 = scmp.ne.s32.totalorder %s70, %s73
      %p82 = scmp.eq.s32.totalorder %s25, 1
      %p83 = por %p81, %p82
      %p84 = scmp.ne.s32.totalorder %s73, %s74
      %p85 = scmp.eq.s32.totalorder %s25, 0
      %p86 = por %p84, %p85
      %p87 = scmp.ne.s32.totalorder %s73, %s74
      %p88 = scmp.eq.s32.totalorder %s26, 1
      %p89 = por %p87, %p88
      %p91 = scmp.ne.s32.totalorder %s74, %s90
      %p92 = scmp.eq.s32.totalorder %s26, 0
      %p93 = por %p91, %p92
      %s94 = ssub.s32 %s27, %s39
      %p95 = scmp.eq.s32.totalorder %s94, 0
      %s97 = sadd.s32 %s96, 1
      %s98 = scalar_select %p95, %s96, %s97
      %p101 = pneg %p95
      %p102 = scmp.eq.s32.totalorder %s20, 1
      %p103 = por %p101, %p102
      %p104 = scmp.ne.s32.totalorder %s96, %s99
      %p105 = scmp.eq.s32.totalorder %s20, 0
      %p106 = por %p104, %p105
      %p107 = scmp.ne.s32.totalorder %s96, %s99
      %p108 = scmp.eq.s32.totalorder %s25, 1
      %p109 = por %p107, %p108
      %p110 = scmp.ne.s32.totalorder %s99, %s100
      %p111 = scmp.eq.s32.totalorder %s25, 0
      %p112 = por %p110, %p111
      %p113 = scmp.ne.s32.totalorder %s99, %s100
      %p114 = scmp.eq.s32.totalorder %s26, 1
      %p115 = por %p113, %p114
      %p117 = scmp.ne.s32.totalorder %s100, %s116
      %p118 = scmp.eq.s32.totalorder %s26, 0
      %p119 = por %p117, %p118
      %s121 = sadd.s32 %s120, 1
      %p124 = scmp.eq.s32.totalorder %s20, 1
      %p125 = scmp.ne.s32.totalorder %s120, %s122
      %p126 = scmp.eq.s32.totalorder %s20, 0
      %p127 = por %p125, %p126
      %p128 = scmp.ne.s32.totalorder %s120, %s122
      %p129 = scmp.eq.s32.totalorder %s25, 1
      %p130 = por %p128, %p129
      %p131 = scmp.ne.s32.totalorder %s122, %s123
      %p132 = scmp.eq.s32.totalorder %s25, 0
      %p133 = por %p131, %p132
      %p134 = scmp.ne.s32.totalorder %s122, %s123
      %p135 = scmp.eq.s32.totalorder %s26, 1
      %p136 = por %p134, %p135
      %p138 = scmp.ne.s32.totalorder %s123, %s137
      %p139 = scmp.eq.s32.totalorder %s26, 0
      %p140 = por %p138, %p139
      %s142 = sadd.s32 %s141, 1
      %p145 = scmp.eq.s32.totalorder %s20, 1
      %p146 = scmp.ne.s32.totalorder %s141, %s143
      %p147 = scmp.eq.s32.totalorder %s20, 0
      %p148 = por %p146, %p147
      %p149 = scmp.ne.s32.totalorder %s141, %s143
      %p150 = scmp.eq.s32.totalorder %s25, 1
      %p151 = por %p149, %p150
      %p152 = scmp.ne.s32.totalorder %s143, %s144
      %p153 = scmp.eq.s32.totalorder %s25, 0
      %p154 = por %p152, %p153
      %p155 = scmp.ne.s32.totalorder %s143, %s144
      %p156 = scmp.eq.s32.totalorder %s26, 1
      %p157 = por %p155, %p156
      %p159 = scmp.ne.s32.totalorder %s144, %s158
      %p160 = scmp.eq.s32.totalorder %s26, 0
      %p161 = por %p159, %p160
      %s163 = sadd.s32 %s162, 1
      %p166 = scmp.eq.s32.totalorder %s20, 1
      %p167 = scmp.ne.s32.totalorder %s162, %s164
      %p168 = scmp.eq.s32.totalorder %s20, 0
      %p169 = por %p167, %p168
      %p170 = scmp.ne.s32.totalorder %s162, %s164
      %p171 = scmp.eq.s32.totalorder %s25, 1
      %p172 = por %p170, %p171
      %p173 = scmp.ne.s32.totalorder %s164, %s165
      %p174 = scmp.eq.s32.totalorder %s25, 0
      %p175 = por %p173, %p174
      %p176 = scmp.ne.s32.totalorder %s164, %s165
      %p177 = scmp.eq.s32.totalorder %s26, 1
      %p178 = por %p176, %p177
      %p180 = scmp.ne.s32.totalorder %s165, %s179
      %p181 = scmp.eq.s32.totalorder %s26, 0
      %p182 = por %p180, %p181
      %s183 = ssub.s32 %s27, %s39
      %p184 = scmp.eq.s32.totalorder %s183, 0
      %s186 = sadd.s32 %s185, 1
      %s187 = scalar_select %p184, %s185, %s186
      %p190 = pneg %p184
      %p191 = scmp.eq.s32.totalorder %s20, 1
      %p192 = por %p190, %p191
      %p193 = scmp.ne.s32.totalorder %s185, %s188
      %p194 = scmp.eq.s32.totalorder %s20, 0
      %p195 = por %p193, %p194
      %p196 = scmp.ne.s32.totalorder %s185, %s188
      %p197 = scmp.eq.s32.totalorder %s25, 1
      %p198 = por %p196, %p197
      %p199 = scmp.ne.s32.totalorder %s188, %s189
      %p200 = scmp.eq.s32.totalorder %s25, 0
      %p201 = por %p199, %p200
      %p202 = scmp.ne.s32.totalorder %s188, %s189
      %p203 = scmp.eq.s32.totalorder %s26, 1
      %p204 = por %p202, %p203
      %p206 = scmp.ne.s32.totalorder %s189, %s205
      %p207 = scmp.eq.s32.totalorder %s26, 0
      %p208 = por %p206, %p207
      %p209 = scmp.le.s32.totalorder 1, %s20
      %p210 = scmp.lt.s32.totalorder %s20, 3
      %p211 = pnand %p209, %p210
      %p212 = pneg %p211
      // Predicated region
      $region9: #{tpu_custom_call.1} parent=5 // pred_check
        _
      $region10: #{tpu_custom_call.1} parent=5 // pred_check_branch
        %214 = sbr.rel (%p211) target = $region12
      $region11: #{tpu_custom_call.1} parent=5 // pred_region
        %s215 = ssub.s32 %s20, 1
        // Predicated region
        $region13: #{tpu_custom_call.1} parent=11 // pred_check
          %p216 = pneg %p86
        $region14: #{tpu_custom_call.1} parent=11 // pred_check_branch
          %218 = sbr.rel (%p216) target = $region16
        $region15: #{tpu_custom_call.1} parent=11 // pred_region
          %s219 = smul.u32 32, %s30
          %s221 = ssub.s32 4096, 4096
          %222 = vsyncadd [#allocation8], %s221
          %s223 = smul.addr %s219, 128
          %s224 = scalar_lea.hbm %s1, %s223
          %s225 = sshll.u32 [#allocation7], 4
          %s226 = int_to_ptr.vmem [resolvable:$true] %s225
          %231 = dma.hbm_to_vmem [thread:$0]  %s224, 4096, %s226, [#allocation8], 128, 128, 8
        $region16: #{tpu_custom_call.1} parent=11 // pred_fallthru
          _
        // Predicated region
        $region17: #{tpu_custom_call.1} parent=11 // pred_check
          %p232 = pneg %p133
        $region18: #{tpu_custom_call.1} parent=11 // pred_check_branch
          %234 = sbr.rel (%p232) target = $region20
        $region19: #{tpu_custom_call.1} parent=11 // pred_region
          %s236 = ssub.s32 2048, 2048
          %237 = vsyncadd [#allocation8], %s236
          %s238 = sshll.u32 [#allocation10], 4
          %s239 = int_to_ptr.vmem [resolvable:$true] %s238
          %244 = dma.hbm_to_vmem [thread:$0]  %s3, 2048, %s239, [#allocation8], 128, 128, 8
        $region20: #{tpu_custom_call.1} parent=11 // pred_fallthru
          _
        // Predicated region
        $region21: #{tpu_custom_call.1} parent=11 // pred_check
          %p245 = pneg %p154
        $region22: #{tpu_custom_call.1} parent=11 // pred_check_branch
          %247 = sbr.rel (%p245) target = $region24
        $region23: #{tpu_custom_call.1} parent=11 // pred_region
          %s249 = ssub.s32 2048, 2048
          %250 = vsyncadd [#allocation12], %s249
          %s251 = sshll.u32 [#allocation11], 4
          %s252 = int_to_ptr.vmem [resolvable:$true] %s251
          %257 = dma.hbm_to_vmem [thread:$0]  %s4, 2048, %s252, [#allocation12], 128, 128, 8
        $region24: #{tpu_custom_call.1} parent=11 // pred_fallthru
          _
        // Predicated region
        $region25: #{tpu_custom_call.1} parent=11 // pred_check
          %p258 = pneg %p175
        $region26: #{tpu_custom_call.1} parent=11 // pred_check_branch
          %260 = sbr.rel (%p258) target = $region28
        $region27: #{tpu_custom_call.1} parent=11 // pred_region
          _
        $region28: #{tpu_custom_call.1} parent=11 // pred_fallthru
          _
      $region12: #{tpu_custom_call.1} parent=5 // pred_fallthru
        _
      %p261 = scmp.lt.s32.totalorder %s20, 2
      // Predicated region
      $region29: #{tpu_custom_call.1} parent=5 // pred_check
        %p262 = pneg %p261
      $region30: #{tpu_custom_call.1} parent=5 // pred_check_branch
        %264 = sbr.rel (%p262) target = $region32
      $region31: #{tpu_custom_call.1} parent=5 // pred_region
        // Predicated region
        $region33: #{tpu_custom_call.1} parent=31 // pred_check
          %p265 = pneg %p54
        $region34: #{tpu_custom_call.1} parent=31 // pred_check_branch
          %267 = sbr.rel (%p265) target = $region36
        $region35: #{tpu_custom_call.1} parent=31 // pred_region
          %s268 = sand.u32 %s20, 1
          %s269 = scalar_lea.sflag [#allocation5], %s268
          %s270 = sand.u32 %s44, 1
          %s271 = smul.addr %s270, 128
          %s272 = scalar_lea.vmem [#allocation4], %s271
          %s273 = smul.u32 8, %s27
          %s274 = smul.u32 2, %s28
          %s276 = ssub.s32 2048, 2048
          %277 = vsyncadd %s269, %s276
          %s278 = smul.addr %s273, 2
          %s279 = sadd.s32 %s274, %s278
          %s280 = smul.addr %s279, 128
          %s281 = scalar_lea.hbm %s0, %s280
          %s282 = sshll.u32 %s272, 4
          %s283 = int_to_ptr.vmem [resolvable:$true] %s282
          %288 = dma.hbm_to_vmem [thread:$0]  %s281, 2048, %s283, %s269, 256, 256, 16
        $region36: #{tpu_custom_call.1} parent=31 // pred_fallthru
          _
        // Predicated region
        $region37: #{tpu_custom_call.1} parent=31 // pred_check
          %p289 = pneg %p106
        $region38: #{tpu_custom_call.1} parent=31 // pred_check_branch
          %291 = sbr.rel (%p289) target = $region40
        $region39: #{tpu_custom_call.1} parent=31 // pred_region
          %s292 = sand.u32 %s20, 1
          %s293 = scalar_lea.sflag [#allocation5], %s292
          %s294 = sand.u32 %s96, 1
          %s295 = smul.addr %s294, 64
          %s296 = scalar_lea.vmem [#allocation9], %s295
          %s297 = smul.u32 8, %s27
          %s299 = ssub.s32 1024, 1024
          %300 = vsyncadd %s293, %s299
          %s301 = smul.addr %s297, 128
          %s302 = scalar_lea.hbm %s2, %s301
          %s303 = sshll.u32 %s296, 4
          %s304 = int_to_ptr.vmem [resolvable:$true] %s303
          %309 = dma.hbm_to_vmem [thread:$0]  %s302, 1024, %s304, %s293, 128, 128, 8
        $region40: #{tpu_custom_call.1} parent=31 // pred_fallthru
          _
      $region32: #{tpu_custom_call.1} parent=5 // pred_fallthru
        _
      %p310 = scmp.le.s32.totalorder 1, %s20
      %p311 = scmp.lt.s32.totalorder %s20, 3
      %p312 = pnand %p310, %p311
      %p313 = pneg %p312
      // Predicated region
      $region41: #{tpu_custom_call.1} parent=5 // pred_check
        _
      $region42: #{tpu_custom_call.1} parent=5 // pred_check_branch
        %315 = sbr.rel (%p312) target = $region44
      $region43: #{tpu_custom_call.1} parent=5 // pred_region
        %s316 = ssub.s32 %s20, 1
        %s317 = sand.u32 %s25, 1
        %s318 = scalar_lea.sflag [#allocation5], %s317
        %s319 = sand.u32 %s47, 1
        %s320 = smul.addr %s319, 128
        %s321 = scalar_lea.vmem [#allocation4], %s320
        // Predicated region
        $region45: #{tpu_custom_call.1} parent=43 // pred_check
          %p322 = pneg %p60
        $region46: #{tpu_custom_call.1} parent=43 // pred_check_branch
          %324 = sbr.rel (%p322) target = $region48
        $region47: #{tpu_custom_call.1} parent=43 // pred_region
          %325 = dma.done %s318, 2048
        $region48: #{tpu_custom_call.1} parent=43 // pred_fallthru
          _
        // Predicated region
        $region49: #{tpu_custom_call.1} parent=43 // pred_check
          %p326 = pneg %p86
        $region50: #{tpu_custom_call.1} parent=43 // pred_check_branch
          %328 = sbr.rel (%p326) target = $region52
        $region51: #{tpu_custom_call.1} parent=43 // pred_region
          %329 = dma.done [#allocation8], 4096
        $region52: #{tpu_custom_call.1} parent=43 // pred_fallthru
          _
        %s330 = sand.u32 %s25, 1
        %s331 = scalar_lea.sflag [#allocation5], %s330
        %s332 = sand.u32 %s99, 1
        %s333 = smul.addr %s332, 64
        %s334 = scalar_lea.vmem [#allocation9], %s333
        // Predicated region
        $region53: #{tpu_custom_call.1} parent=43 // pred_check
          %p335 = pneg %p112
        $region54: #{tpu_custom_call.1} parent=43 // pred_check_branch
          %337 = sbr.rel (%p335) target = $region56
        $region55: #{tpu_custom_call.1} parent=43 // pred_region
          %338 = dma.done %s331, 1024
        $region56: #{tpu_custom_call.1} parent=43 // pred_fallthru
          _
        // Predicated region
        $region57: #{tpu_custom_call.1} parent=43 // pred_check
          %p339 = pneg %p133
        $region58: #{tpu_custom_call.1} parent=43 // pred_check_branch
          %341 = sbr.rel (%p339) target = $region60
        $region59: #{tpu_custom_call.1} parent=43 // pred_region
          %342 = dma.done [#allocation8], 2048
        $region60: #{tpu_custom_call.1} parent=43 // pred_fallthru
          _
        // Predicated region
        $region61: #{tpu_custom_call.1} parent=43 // pred_check
          %p343 = pneg %p154
        $region62: #{tpu_custom_call.1} parent=43 // pred_check_branch
          %345 = sbr.rel (%p343) target = $region64
        $region63: #{tpu_custom_call.1} parent=43 // pred_region
          %346 = dma.done [#allocation12], 2048
        $region64: #{tpu_custom_call.1} parent=43 // pred_fallthru
          _
        %s347 = sand.u32 %s25, 1
        %s348 = scalar_lea.sflag [#allocation5], %s347
        %s349 = sand.u32 %s47, 1
        %s350 = smul.addr %s349, 128
        %s351 = scalar_lea.vmem [#allocation4], %s350
        %p352 = pneg %p60
        %p353 = pneg %p57
        %p354 = pneg %p86
        %p355 = pneg %p83
        %s356 = sand.u32 %s25, 1
        %s357 = scalar_lea.sflag [#allocation5], %s356
        %s358 = sand.u32 %s99, 1
        %s359 = smul.addr %s358, 64
        %s360 = scalar_lea.vmem [#allocation9], %s359
        %p361 = pneg %p112
        %p362 = pneg %p109
        %p363 = pneg %p133
        %p364 = pneg %p130
        %p365 = pneg %p154
        %p366 = pneg %p151
        %p367 = pneg %p175
        %p368 = pneg %p172
        %p369 = pneg %p201
        %p370 = pneg %p198
        %s371 = sand.u32 %s188, 1
        %s372 = scalar_lea.sflag [#allocation6], %s371
        %s373 = sand.u32 %s188, 1
        %s374 = smul.addr %s373, 64
        %s375 = scalar_lea.vmem [#allocation13], %s374
        %s376 = smul.u32 8, %s29
        %s377 = smul.u32 2, %s30
        %s378 = smul.u32 32, %s30
        %s379 = smul.u32 8, %s29
        %s380 = smul.u32 8, %s29
        %p381 = scmp.eq.s32.totalorder %s30, 0
        // Predicated region
        $region65: #{tpu_custom_call.1} parent=43 // pred_check
          %p382 = pneg %p381
        $region66: #{tpu_custom_call.1} parent=43 // pred_check_branch
          %384 = sbr.rel (%p382) target = $region68
        $region67: #{tpu_custom_call.1} parent=43 // pred_region
          %385 = vst [vmem:[#allocation2] sm:$0xff] 0.0
          %386 = vst [vmem:[#allocation2 + $0x8] sm:$0xff] 0.0
          %387 = vst [vmem:[#allocation2 + $0x10] sm:$0xff] 0.0
          %388 = vst [vmem:[#allocation2 + $0x18] sm:$0xff] 0.0
          %389 = vst [vmem:[#allocation2 + $0x20] sm:$0xff] 0.0
          %390 = vst [vmem:[#allocation2 + $0x28] sm:$0xff] 0.0
          %391 = vst [vmem:[#allocation2 + $0x30] sm:$0xff] 0.0
          %392 = vst [vmem:[#allocation2 + $0x38] sm:$0xff] 0.0
          %v393 = vld [vmem:[%s334] sm:$0xff]
          %v394 = vld [vmem:[%s334 + $0x8] sm:$0xff]
          %v395 = vld [vmem:[%s334 + $0x10] sm:$0xff]
          %v396 = vld [vmem:[%s334 + $0x18] sm:$0xff]
          %v397 = vld [vmem:[%s334 + $0x20] sm:$0xff]
          %v398 = vld [vmem:[%s334 + $0x28] sm:$0xff]
          %v399 = vld [vmem:[%s334 + $0x30] sm:$0xff]
          %v400 = vld [vmem:[%s334 + $0x38] sm:$0xff]
          %v401 = vld [vmem:[#allocation10] sm:$0xff]
          %v402 = vld [vmem:[#allocation10 + $0x8] sm:$0xff]
          %v403 = vld [vmem:[#allocation10 + $0x10] sm:$0xff]
          %v404 = vld [vmem:[#allocation10 + $0x18] sm:$0xff]
          %v405 = vld [vmem:[#allocation10 + $0x20] sm:$0xff]
          %v406 = vld [vmem:[#allocation10 + $0x28] sm:$0xff]
          %v407 = vld [vmem:[#allocation10 + $0x30] sm:$0xff]
          %v408 = vld [vmem:[#allocation10 + $0x38] sm:$0xff]
          %v409 = vld [vmem:[#allocation10 + $0x40] sm:$0xff]
          %v410 = vld [vmem:[#allocation10 + $0x48] sm:$0xff]
          %v411 = vld [vmem:[#allocation10 + $0x50] sm:$0xff]
          %v412 = vld [vmem:[#allocation10 + $0x58] sm:$0xff]
          %v413 = vld [vmem:[#allocation10 + $0x60] sm:$0xff]
          %v414 = vld [vmem:[#allocation10 + $0x68] sm:$0xff]
          %v415 = vld [vmem:[#allocation10 + $0x70] sm:$0xff]
          %v416 = vld [vmem:[#allocation10 + $0x78] sm:$0xff]
          %417 = vmatprep.subr.mxu0 0.0
          %418 = vmatpush1.msra.mxu0 %v401
          %419 = vmatprep.subr.mxu0 0.0
          %420 = vmatpush1.msra.mxu0 %v402
          %421 = vmatprep.subr.mxu0 0.0
          %422 = vmatpush1.msra.mxu0 %v403
          %423 = vmatprep.subr.mxu0 0.0
          %424 = vmatpush1.msra.mxu0 %v404
          %425 = vmatprep.subr.mxu0 0.0
          %426 = vmatpush1.msra.mxu0 %v405
          %427 = vmatprep.subr.mxu0 0.0
          %428 = vmatpush1.msra.mxu0 %v406
          %429 = vmatprep.subr.mxu0 0.0
          %430 = vmatpush1.msra.mxu0 %v407
          %431 = vmatprep.subr.mxu0 0.0
          %432 = vmatpush1.msra.mxu0 %v408
          %433 = vmatprep.subr.mxu0 0.0
          %434 = vmatpush1.msra.mxu0 %v409
          %435 = vmatprep.subr.mxu0 0.0
          %436 = vmatpush1.msra.mxu0 %v410
          %437 = vmatprep.subr.mxu0 0.0
          %438 = vmatpush1.msra.mxu0 %v411
          %439 = vmatprep.subr.mxu0 0.0
          %440 = vmatpush1.msra.mxu0 %v412
          %441 = vmatprep.subr.mxu0 0.0
          %442 = vmatpush1.msra.mxu0 %v413
          %443 = vmatprep.subr.mxu0 0.0
          %444 = vmatpush1.msra.mxu0 %v414
          %445 = vmatprep.subr.mxu0 0.0
          %446 = vmatpush1.msra.mxu0 %v415
          %447 = vmatprep.subr.mxu0 0.0
          %448 = vmatpush1.msra.mxu0 %v416
          %449 = vmatprep.subr.mxu0 0.0
          %450 = vmatpush1.msra.mxu0 0.0
          %451 = vmatprep.subr.mxu0 0.0
          %452 = vmatpush1.msra.mxu0 0.0
          %453 = vmatprep.subr.mxu0 0.0
          %454 = vmatpush1.msra.mxu0 0.0
          %455 = vmatprep.subr.mxu0 0.0
          %456 = vmatpush1.msra.mxu0 0.0
          %457 = vmatprep.subr.mxu0 0.0
          %458 = vmatpush1.msra.mxu0 0.0
          %459 = vmatprep.subr.mxu0 0.0
          %460 = vmatpush1.msra.mxu0 0.0
          %461 = vmatprep.subr.mxu0 0.0
          %462 = vmatpush1.msra.mxu0 0.0
          %463 = vmatprep.subr.mxu0 0.0
          %464 = vmatpush1.msra.mxu0 0.0
          %465 = vmatprep.subr.mxu0 0.0
          %466 = vmatpush1.msra.mxu0 0.0
          %467 = vmatprep.subr.mxu0 0.0
          %468 = vmatpush1.msra.mxu0 0.0
          %469 = vmatprep.subr.mxu0 0.0
          %470 = vmatpush1.msra.mxu0 0.0
          %471 = vmatprep.subr.mxu0 0.0
          %472 = vmatpush1.msra.mxu0 0.0
          %473 = vmatprep.subr.mxu0 0.0
          %474 = vmatpush1.msra.mxu0 0.0
          %475 = vmatprep.subr.mxu0 0.0
          %476 = vmatpush1.msra.mxu0 0.0
          %477 = vmatprep.subr.mxu0 0.0
          %478 = vmatpush1.msra.mxu0 0.0
          %479 = vmatprep.subr.mxu0 0.0
          %480 = vmatpush1.msra.mxu0 0.0
          %481 = vmatprep.mubr.f32.mxu0 0.0
          %482 = vmatmul.mubr.f32.gmra.mrb[0].mxu0 %v393
          %v483 = vpop.f32.mrb[0].mxu0
          %v484 = vadd.f32 0.0, %v483
          %v485 = vpop.f32.mrb[0].mxu0
          %486 = vmatprep.mubr.f32.mxu0 0.0
          %487 = vmatmul.mubr.f32.gmra.mrb[0].mxu0 %v394
          %v488 = vpop.f32.mrb[0].mxu0
          %v489 = vadd.f32 0.0, %v488
          %v490 = vpop.f32.mrb[0].mxu0
          %491 = vmatprep.mubr.f32.mxu0 0.0
          %492 = vmatmul.mubr.f32.gmra.mrb[0].mxu0 %v395
          %v493 = vpop.f32.mrb[0].mxu0
          %v494 = vadd.f32 0.0, %v493
          %v495 = vpop.f32.mrb[0].mxu0
          %496 = vmatprep.mubr.f32.mxu0 0.0
          %497 = vmatmul.mubr.f32.gmra.mrb[0].mxu0 %v396
          %v498 = vpop.f32.mrb[0].mxu0
          %v499 = vadd.f32 0.0, %v498
          %v500 = vpop.f32.mrb[0].mxu0
          %501 = vmatprep.mubr.f32.mxu0 0.0
          %502 = vmatmul.mubr.f32.gmra.mrb[0].mxu0 %v397
          %v503 = vpop.f32.mrb[0].mxu0
          %v504 = vadd.f32 0.0, %v503
          %v505 = vpop.f32.mrb[0].mxu0
          %506 = vmatprep.mubr.f32.mxu0 0.0
          %507 = vmatmul.mubr.f32.gmra.mrb[0].mxu0 %v398
          %v508 = vpop.f32.mrb[0].mxu0
          %v509 = vadd.f32 0.0, %v508
          %v510 = vpop.f32.mrb[0].mxu0
          %511 = vmatprep.mubr.f32.mxu0 0.0
          %512 = vmatmul.mubr.f32.gmra.mrb[0].mxu0 %v399
          %v513 = vpop.f32.mrb[0].mxu0
          %v514 = vadd.f32 0.0, %v513
          %v515 = vpop.f32.mrb[0].mxu0
          %516 = vmatprep.mubr.f32.mxu0 0.0
          %517 = vmatmul.mubr.f32.gmra.mrb[0].mxu0 %v400
          %v518 = vpop.f32.mrb[0].mxu0
          %v519 = vadd.f32 0.0, %v518
          %v520 = vpop.f32.mrb[0].mxu0
          %521 = vdwg.mxu0
          %522 = vst [vmem:[#allocation3] sm:$0xff] %v484
          %523 = vst [vmem:[#allocation3 + $0x8] sm:$0xff] %v489
          %524 = vst [vmem:[#allocation3 + $0x10] sm:$0xff] %v494
          %525 = vst [vmem:[#allocation3 + $0x18] sm:$0xff] %v499
          %526 = vst [vmem:[#allocation3 + $0x20] sm:$0xff] %v504
          %527 = vst [vmem:[#allocation3 + $0x28] sm:$0xff] %v509
          %528 = vst [vmem:[#allocation3 + $0x30] sm:$0xff] %v514
          %529 = vst [vmem:[#allocation3 + $0x38] sm:$0xff] %v519
        $region68: #{tpu_custom_call.1} parent=43 // pred_fallthru
          _
        %v530 = vld [vmem:[#allocation2] sm:$0xff]
        %v531 = vld [vmem:[#allocation2 + $0x8] sm:$0xff]
        %v532 = vld [vmem:[#allocation2 + $0x10] sm:$0xff]
        %v533 = vld [vmem:[#allocation2 + $0x18] sm:$0xff]
        %v534 = vld [vmem:[#allocation2 + $0x20] sm:$0xff]
        %v535 = vld [vmem:[#allocation2 + $0x28] sm:$0xff]
        %v536 = vld [vmem:[#allocation2 + $0x30] sm:$0xff]
        %v537 = vld [vmem:[#allocation2 + $0x38] sm:$0xff]
        %v538 = vld [vmem:[%s321] sm:$0xff]
        %v539 = vld [vmem:[%s321 + $0x8] sm:$0xff]
        %v540 = vld [vmem:[%s321 + $0x10] sm:$0xff]
        %v541 = vld [vmem:[%s321 + $0x18] sm:$0xff]
        %v542 = vld [vmem:[%s321 + $0x20] sm:$0xff]
        %v543 = vld [vmem:[%s321 + $0x28] sm:$0xff]
        %v544 = vld [vmem:[%s321 + $0x30] sm:$0xff]
        %v545 = vld [vmem:[%s321 + $0x38] sm:$0xff]
        %v546 = vld [vmem:[%s321 + $0x40] sm:$0xff]
        %v547 = vld [vmem:[%s321 + $0x48] sm:$0xff]
        %v548 = vld [vmem:[%s321 + $0x50] sm:$0xff]
        %v549 = vld [vmem:[%s321 + $0x58] sm:$0xff]
        %v550 = vld [vmem:[%s321 + $0x60] sm:$0xff]
        %v551 = vld [vmem:[%s321 + $0x68] sm:$0xff]
        %v552 = vld [vmem:[%s321 + $0x70] sm:$0xff]
        %v553 = vld [vmem:[%s321 + $0x78] sm:$0xff]
        %v554 = vld [vmem:[#allocation7] sm:$0xff]
        %v555 = vld [vmem:[#allocation7 + $0x8] sm:$0xff]
        %v556 = vld [vmem:[#allocation7 + $0x10] sm:$0xff]
        %v557 = vld [vmem:[#allocation7 + $0x18] sm:$0xff]
        %v558 = vld [vmem:[#allocation7 + $0x20] sm:$0xff]
        %v559 = vld [vmem:[#allocation7 + $0x28] sm:$0xff]
        %v560 = vld [vmem:[#allocation7 + $0x30] sm:$0xff]
        %v561 = vld [vmem:[#allocation7 + $0x38] sm:$0xff]
        %v562 = vld [vmem:[#allocation7 + $0x40] sm:$0xff]
        %v563 = vld [vmem:[#allocation7 + $0x48] sm:$0xff]
        %v564 = vld [vmem:[#allocation7 + $0x50] sm:$0xff]
        %v565 = vld [vmem:[#allocation7 + $0x58] sm:$0xff]
        %v566 = vld [vmem:[#allocation7 + $0x60] sm:$0xff]
        %v567 = vld [vmem:[#allocation7 + $0x68] sm:$0xff]
        %v568 = vld [vmem:[#allocation7 + $0x70] sm:$0xff]
        %v569 = vld [vmem:[#allocation7 + $0x78] sm:$0xff]
        %v570 = vld [vmem:[#allocation7 + $0x80] sm:$0xff]
        %v571 = vld [vmem:[#allocation7 + $0x88] sm:$0xff]
        %v572 = vld [vmem:[#allocation7 + $0x90] sm:$0xff]
        %v573 = vld [vmem:[#allocation7 + $0x98] sm:$0xff]
        %v574 = vld [vmem:[#allocation7 + $0xa0] sm:$0xff]
        %v575 = vld [vmem:[#allocation7 + $0xa8] sm:$0xff]
        %v576 = vld [vmem:[#allocation7 + $0xb0] sm:$0xff]
        %v577 = vld [vmem:[#allocation7 + $0xb8] sm:$0xff]
        %v578 = vld [vmem:[#allocation7 + $0xc0] sm:$0xff]
        %v579 = vld [vmem:[#allocation7 + $0xc8] sm:$0xff]
        %v580 = vld [vmem:[#allocation7 + $0xd0] sm:$0xff]
        %v581 = vld [vmem:[#allocation7 + $0xd8] sm:$0xff]
        %v582 = vld [vmem:[#allocation7 + $0xe0] sm:$0xff]
        %v583 = vld [vmem:[#allocation7 + $0xe8] sm:$0xff]
        %v584 = vld [vmem:[#allocation7 + $0xf0] sm:$0xff]
        %v585 = vld [vmem:[#allocation7 + $0xf8] sm:$0xff]
        %586 = vmatprep.subr.mxu0 0.0
        %587 = vmatpush1.msra.mxu0 %v554
        %588 = vmatprep.subr.mxu0 0.0
        %589 = vmatpush1.msra.mxu0 %v555
        %590 = vmatprep.subr.mxu0 0.0
        %591 = vmatpush1.msra.mxu0 %v556
        %592 = vmatprep.subr.mxu0 0.0
        %593 = vmatpush1.msra.mxu0 %v557
        %594 = vmatprep.subr.mxu0 0.0
        %595 = vmatpush1.msra.mxu0 %v558
        %596 = vmatprep.subr.mxu0 0.0
        %597 = vmatpush1.msra.mxu0 %v559
        %598 = vmatprep.subr.mxu0 0.0
        %599 = vmatpush1.msra.mxu0 %v560
        %600 = vmatprep.subr.mxu0 0.0
        %601 = vmatpush1.msra.mxu0 %v561
        %602 = vmatprep.subr.mxu0 0.0
        %603 = vmatpush1.msra.mxu0 %v562
        %604 = vmatprep.subr.mxu0 0.0
        %605 = vmatpush1.msra.mxu0 %v563
        %606 = vmatprep.subr.mxu0 0.0
        %607 = vmatpush1.msra.mxu0 %v564
        %608 = vmatprep.subr.mxu0 0.0
        %609 = vmatpush1.msra.mxu0 %v565
        %610 = vmatprep.subr.mxu0 0.0
        %611 = vmatpush1.msra.mxu0 %v566
        %612 = vmatprep.subr.mxu0 0.0
        %613 = vmatpush1.msra.mxu0 %v567
        %614 = vmatprep.subr.mxu0 0.0
        %615 = vmatpush1.msra.mxu0 %v568
        %616 = vmatprep.subr.mxu0 0.0
        %617 = vmatpush1.msra.mxu0 %v569
        %618 = vmatprep.subr.mxu0 0.0
        %619 = vmatpush1.msra.mxu0 %v570
        %620 = vmatprep.subr.mxu0 0.0
        %621 = vmatpush1.msra.mxu0 %v571
        %622 = vmatprep.subr.mxu0 0.0
        %623 = vmatpush1.msra.mxu0 %v572
        %624 = vmatprep.subr.mxu0 0.0
        %625 = vmatpush1.msra.mxu0 %v573
        %626 = vmatprep.subr.mxu0 0.0
        %627 = vmatpush1.msra.mxu0 %v574
        %628 = vmatprep.subr.mxu0 0.0
        %629 = vmatpush1.msra.mxu0 %v575
        %630 = vmatprep.subr.mxu0 0.0
        %631 = vmatpush1.msra.mxu0 %v576
        %632 = vmatprep.subr.mxu0 0.0
        %633 = vmatpush1.msra.mxu0 %v577
        %634 = vmatprep.subr.mxu0 0.0
        %635 = vmatpush1.msra.mxu0 %v578
        %636 = vmatprep.subr.mxu0 0.0
        %637 = vmatpush1.msra.mxu0 %v579
        %638 = vmatprep.subr.mxu0 0.0
        %639 = vmatpush1.msra.mxu0 %v580
        %640 = vmatprep.subr.mxu0 0.0
        %641 = vmatpush1.msra.mxu0 %v581
        %642 = vmatprep.subr.mxu0 0.0
        %643 = vmatpush1.msra.mxu0 %v582
        %644 = vmatprep.subr.mxu0 0.0
        %645 = vmatpush1.msra.mxu0 %v583
        %646 = vmatprep.subr.mxu0 0.0
        %647 = vmatpush1.msra.mxu0 %v584
        %648 = vmatprep.subr.mxu0 0.0
        %649 = vmatpush1.msra.mxu0 %v585
        %650 = vmatprep.mubr.f32.mxu0 %v539
        %651 = vmatmul.mubr.f32.gmra.mrb[0].mxu0 %v538
        %v652 = vpop.f32.mrb[0].mxu0
        %v653 = vadd.f32 0.0, %v652
        %v654 = vpop.f32.mrb[0].mxu0
        %655 = vmatprep.mubr.f32.mxu0 %v541
        %656 = vmatmul.mubr.f32.gmra.mrb[0].mxu0 %v540
        %v657 = vpop.f32.mrb[0].mxu0
        %v658 = vadd.f32 0.0, %v657
        %v659 = vpop.f32.mrb[0].mxu0
        %660 = vmatprep.mubr.f32.mxu0 %v543
        %661 = vmatmul.mubr.f32.gmra.mrb[0].mxu0 %v542
        %v662 = vpop.f32.mrb[0].mxu0
        %v663 = vadd.f32 0.0, %v662
        %v664 = vpop.f32.mrb[0].mxu0
        %665 = vmatprep.mubr.f32.mxu0 %v545
        %666 = vmatmul.mubr.f32.gmra.mrb[0].mxu0 %v544
        %v667 = vpop.f32.mrb[0].mxu0
        %v668 = vadd.f32 0.0, %v667
        %v669 = vpop.f32.mrb[0].mxu0
        %670 = vmatprep.mubr.f32.mxu0 %v547
        %671 = vmatmul.mubr.f32.gmra.mrb[0].mxu0 %v546
        %v672 = vpop.f32.mrb[0].mxu0
        %v673 = vadd.f32 0.0, %v672
        %v674 = vpop.f32.mrb[0].mxu0
        %675 = vmatprep.mubr.f32.mxu0 %v549
        %676 = vmatmul.mubr.f32.gmra.mrb[0].mxu0 %v548
        %v677 = vpop.f32.mrb[0].mxu0
        %v678 = vadd.f32 0.0, %v677
        %v679 = vpop.f32.mrb[0].mxu0
        %680 = vmatprep.mubr.f32.mxu0 %v551
        %681 = vmatmul.mubr.f32.gmra.mrb[0].mxu0 %v550
        %v682 = vpop.f32.mrb[0].mxu0
        %v683 = vadd.f32 0.0, %v682
        %v684 = vpop.f32.mrb[0].mxu0
        %685 = vmatprep.mubr.f32.mxu0 %v553
        %686 = vmatmul.mubr.f32.gmra.mrb[0].mxu0 %v552
        %v687 = vpop.f32.mrb[0].mxu0
        %v688 = vadd.f32 0.0, %v687
        %v689 = vpop.f32.mrb[0].mxu0
        %690 = vdwg.mxu0
        %v691 = vadd.f32 %v530, %v653
        %v692 = vadd.f32 %v531, %v658
        %v693 = vadd.f32 %v532, %v663
        %v694 = vadd.f32 %v533, %v668
        %v695 = vadd.f32 %v534, %v673
        %v696 = vadd.f32 %v535, %v678
        %v697 = vadd.f32 %v536, %v683
        %v698 = vadd.f32 %v537, %v688
        %699 = vst [vmem:[#allocation2] sm:$0xff] %v691
        %700 = vst [vmem:[#allocation2 + $0x8] sm:$0xff] %v692
        %701 = vst [vmem:[#allocation2 + $0x10] sm:$0xff] %v693
        %702 = vst [vmem:[#allocation2 + $0x18] sm:$0xff] %v694
        %703 = vst [vmem:[#allocation2 + $0x20] sm:$0xff] %v695
        %704 = vst [vmem:[#allocation2 + $0x28] sm:$0xff] %v696
        %705 = vst [vmem:[#allocation2 + $0x30] sm:$0xff] %v697
        %706 = vst [vmem:[#allocation2 + $0x38] sm:$0xff] %v698
        // Predicated region
        $region69: #{tpu_custom_call.1} parent=43 // pred_check
          %p707 = pneg %p381
        $region70: #{tpu_custom_call.1} parent=43 // pred_check_branch
          %709 = sbr.rel (%p707) target = $region72
        $region71: #{tpu_custom_call.1} parent=43 // pred_region
          %v710 = vld [vmem:[#allocation2] sm:$0xff]
          %v711 = vld [vmem:[#allocation2 + $0x8] sm:$0xff]
          %v712 = vld [vmem:[#allocation2 + $0x10] sm:$0xff]
          %v713 = vld [vmem:[#allocation2 + $0x18] sm:$0xff]
          %v714 = vld [vmem:[#allocation2 + $0x20] sm:$0xff]
          %v715 = vld [vmem:[#allocation2 + $0x28] sm:$0xff]
          %v716 = vld [vmem:[#allocation2 + $0x30] sm:$0xff]
          %v717 = vld [vmem:[#allocation2 + $0x38] sm:$0xff]
          %v718 = vld [vmem:[#allocation3] sm:$0xff]
          %v719 = vld [vmem:[#allocation3 + $0x8] sm:$0xff]
          %v720 = vld [vmem:[#allocation3 + $0x10] sm:$0xff]
          %v721 = vld [vmem:[#allocation3 + $0x18] sm:$0xff]
          %v722 = vld [vmem:[#allocation3 + $0x20] sm:$0xff]
          %v723 = vld [vmem:[#allocation3 + $0x28] sm:$0xff]
          %v724 = vld [vmem:[#allocation3 + $0x30] sm:$0xff]
          %v725 = vld [vmem:[#allocation3 + $0x38] sm:$0xff]
          %v726 = vld [vmem:[#allocation11] sm:$0xff]
          %v727 = vld [vmem:[#allocation11 + $0x8] sm:$0xff]
          %v728 = vld [vmem:[#allocation11 + $0x10] sm:$0xff]
          %v729 = vld [vmem:[#allocation11 + $0x18] sm:$0xff]
          %v730 = vld [vmem:[#allocation11 + $0x20] sm:$0xff]
          %v731 = vld [vmem:[#allocation11 + $0x28] sm:$0xff]
          %v732 = vld [vmem:[#allocation11 + $0x30] sm:$0xff]
          %v733 = vld [vmem:[#allocation11 + $0x38] sm:$0xff]
          %v734 = vld [vmem:[#allocation11 + $0x40] sm:$0xff]
          %v735 = vld [vmem:[#allocation11 + $0x48] sm:$0xff]
          %v736 = vld [vmem:[#allocation11 + $0x50] sm:$0xff]
          %v737 = vld [vmem:[#allocation11 + $0x58] sm:$0xff]
          %v738 = vld [vmem:[#allocation11 + $0x60] sm:$0xff]
          %v739 = vld [vmem:[#allocation11 + $0x68] sm:$0xff]
          %v740 = vld [vmem:[#allocation11 + $0x70] sm:$0xff]
          %v741 = vld [vmem:[#allocation11 + $0x78] sm:$0xff]
          %742 = vmatprep.subr.mxu0 0.0
          %743 = vmatpush1.msra.mxu0 %v726
          %744 = vmatprep.subr.mxu0 0.0
          %745 = vmatpush1.msra.mxu0 %v727
          %746 = vmatprep.subr.mxu0 0.0
          %747 = vmatpush1.msra.mxu0 %v728
          %748 = vmatprep.subr.mxu0 0.0
          %749 = vmatpush1.msra.mxu0 %v729
          %750 = vmatprep.subr.mxu0 0.0
          %751 = vmatpush1.msra.mxu0 %v730
          %752 = vmatprep.subr.mxu0 0.0
          %753 = vmatpush1.msra.mxu0 %v731
          %754 = vmatprep.subr.mxu0 0.0
          %755 = vmatpush1.msra.mxu0 %v732
          %756 = vmatprep.subr.mxu0 0.0
          %757 = vmatpush1.msra.mxu0 %v733
          %758 = vmatprep.subr.mxu0 0.0
          %759 = vmatpush1.msra.mxu0 %v734
          %760 = vmatprep.subr.mxu0 0.0
          %761 = vmatpush1.msra.mxu0 %v735
          %762 = vmatprep.subr.mxu0 0.0
          %763 = vmatpush1.msra.mxu0 %v736
          %764 = vmatprep.subr.mxu0 0.0
          %765 = vmatpush1.msra.mxu0 %v737
          %766 = vmatprep.subr.mxu0 0.0
          %767 = vmatpush1.msra.mxu0 %v738
          %768 = vmatprep.subr.mxu0 0.0
          %769 = vmatpush1.msra.mxu0 %v739
          %770 = vmatprep.subr.mxu0 0.0
          %771 = vmatpush1.msra.mxu0 %v740
          %772 = vmatprep.subr.mxu0 0.0
          %773 = vmatpush1.msra.mxu0 %v741
          %774 = vmatprep.subr.mxu0 0.0
          %775 = vmatpush1.msra.mxu0 0.0
          %776 = vmatprep.subr.mxu0 0.0
          %777 = vmatpush1.msra.mxu0 0.0
          %778 = vmatprep.subr.mxu0 0.0
          %779 = vmatpush1.msra.mxu0 0.0
          %780 = vmatprep.subr.mxu0 0.0
          %781 = vmatpush1.msra.mxu0 0.0
          %782 = vmatprep.subr.mxu0 0.0
          %783 = vmatpush1.msra.mxu0 0.0
          %784 = vmatprep.subr.mxu0 0.0
          %785 = vmatpush1.msra.mxu0 0.0
          %786 = vmatprep.subr.mxu0 0.0
          %787 = vmatpush1.msra.mxu0 0.0
          %788 = vmatprep.subr.mxu0 0.0
          %789 = vmatpush1.msra.mxu0 0.0
          %790 = vmatprep.subr.mxu0 0.0
          %791 = vmatpush1.msra.mxu0 0.0
          %792 = vmatprep.subr.mxu0 0.0
          %793 = vmatpush1.msra.mxu0 0.0
          %794 = vmatprep.subr.mxu0 0.0
          %795 = vmatpush1.msra.mxu0 0.0
          %796 = vmatprep.subr.mxu0 0.0
          %797 = vmatpush1.msra.mxu0 0.0
          %798 = vmatprep.subr.mxu0 0.0
          %799 = vmatpush1.msra.mxu0 0.0
          %800 = vmatprep.subr.mxu0 0.0
          %801 = vmatpush1.msra.mxu0 0.0
          %802 = vmatprep.subr.mxu0 0.0
          %803 = vmatpush1.msra.mxu0 0.0
          %804 = vmatprep.subr.mxu0 0.0
          %805 = vmatpush1.msra.mxu0 0.0
          %806 = vmatprep.mubr.f32.mxu0 0.0
          %807 = vmatmul.mubr.f32.gmra.mrb[0].mxu0 %v710
          %v808 = vpop.f32.mrb[0].mxu0
          %v809 = vadd.f32 0.0, %v808
          %v810 = vpop.f32.mrb[0].mxu0
          %811 = vmatprep.mubr.f32.mxu0 0.0
          %812 = vmatmul.mubr.f32.gmra.mrb[0].mxu0 %v711
          %v813 = vpop.f32.mrb[0].mxu0
          %v814 = vadd.f32 0.0, %v813
          %v815 = vpop.f32.mrb[0].mxu0
          %816 = vmatprep.mubr.f32.mxu0 0.0
          %817 = vmatmul.mubr.f32.gmra.mrb[0].mxu0 %v712
          %v818 = vpop.f32.mrb[0].mxu0
          %v819 = vadd.f32 0.0, %v818
          %v820 = vpop.f32.mrb[0].mxu0
          %821 = vmatprep.mubr.f32.mxu0 0.0
          %822 = vmatmul.mubr.f32.gmra.mrb[0].mxu0 %v713
          %v823 = vpop.f32.mrb[0].mxu0
          %v824 = vadd.f32 0.0, %v823
          %v825 = vpop.f32.mrb[0].mxu0
          %826 = vmatprep.mubr.f32.mxu0 0.0
          %827 = vmatmul.mubr.f32.gmra.mrb[0].mxu0 %v714
          %v828 = vpop.f32.mrb[0].mxu0
          %v829 = vadd.f32 0.0, %v828
          %v830 = vpop.f32.mrb[0].mxu0
          %831 = vmatprep.mubr.f32.mxu0 0.0
          %832 = vmatmul.mubr.f32.gmra.mrb[0].mxu0 %v715
          %v833 = vpop.f32.mrb[0].mxu0
          %v834 = vadd.f32 0.0, %v833
          %v835 = vpop.f32.mrb[0].mxu0
          %836 = vmatprep.mubr.f32.mxu0 0.0
          %837 = vmatmul.mubr.f32.gmra.mrb[0].mxu0 %v716
          %v838 = vpop.f32.mrb[0].mxu0
          %v839 = vadd.f32 0.0, %v838
          %v840 = vpop.f32.mrb[0].mxu0
          %841 = vmatprep.mubr.f32.mxu0 0.0
          %842 = vmatmul.mubr.f32.gmra.mrb[0].mxu0 %v717
          %v843 = vpop.f32.mrb[0].mxu0
          %v844 = vadd.f32 0.0, %v843
          %v845 = vpop.f32.mrb[0].mxu0
          %846 = vdwg.mxu0
          %v847 = vadd.f32 %v718, %v809
          %v848 = vadd.f32 %v719, %v814
          %v849 = vadd.f32 %v720, %v819
          %v850 = vadd.f32 %v721, %v824
          %v851 = vadd.f32 %v722, %v829
          %v852 = vadd.f32 %v723, %v834
          %v853 = vadd.f32 %v724, %v839
          %v854 = vadd.f32 %v725, %v844
          %v855 = vld [vmem:[%s5] sm:$0x1]
          %v857 = vlaneseq
          %v858 = vshrl.u32 %v857, 7
          %v859 = vsub.s32 0, %v858
          %v860 = vrot.slane %v855, %v859
          %v862 = vadd.f32 %v847, %v860
          %v863 = vadd.f32 %v848, %v860
          %v864 = vadd.f32 %v849, %v860
          %v865 = vadd.f32 %v850, %v860
          %v866 = vadd.f32 %v851, %v860
          %v867 = vadd.f32 %v852, %v860
          %v868 = vadd.f32 %v853, %v860
          %v869 = vadd.f32 %v854, %v860
          %v870 = vmax.f32 %v862, 0.0
          %v871 = vmax.f32 %v863, 0.0
          %v872 = vmax.f32 %v864, 0.0
          %v873 = vmax.f32 %v865, 0.0
          %v874 = vmax.f32 %v866, 0.0
          %v875 = vmax.f32 %v867, 0.0
          %v876 = vmax.f32 %v868, 0.0
          %v877 = vmax.f32 %v869, 0.0
          %878 = vst [vmem:[%s375] sm:$0xff] %v870
          %879 = vst [vmem:[%s375 + $0x8] sm:$0xff] %v871
          %880 = vst [vmem:[%s375 + $0x10] sm:$0xff] %v872
          %881 = vst [vmem:[%s375 + $0x18] sm:$0xff] %v873
          %882 = vst [vmem:[%s375 + $0x20] sm:$0xff] %v874
          %883 = vst [vmem:[%s375 + $0x28] sm:$0xff] %v875
          %884 = vst [vmem:[%s375 + $0x30] sm:$0xff] %v876
          %885 = vst [vmem:[%s375 + $0x38] sm:$0xff] %v877
        $region72: #{tpu_custom_call.1} parent=43 // pred_fallthru
          _
        %s886 = sand.u32 %s188, 1
        %s887 = scalar_lea.sflag [#allocation6], %s886
        %s888 = sand.u32 %s188, 1
        %s889 = smul.addr %s888, 64
        %s890 = scalar_lea.vmem [#allocation13], %s889
        // Predicated region
        $region73: #{tpu_custom_call.1} parent=43 // pred_check
          %p891 = pneg %p198
        $region74: #{tpu_custom_call.1} parent=43 // pred_check_branch
          %893 = sbr.rel (%p891) target = $region76
        $region75: #{tpu_custom_call.1} parent=43 // pred_region
          %s894 = smul.u32 8, %s29
          %s896 = ssub.s32 1024, 1024
          %897 = vsyncadd %s887, %s896
          %s898 = smul.addr %s894, 128
          %s899 = scalar_lea.hbm %s6, %s898
          %s900 = sshll.u32 %s890, 4
          %s901 = int_to_ptr.vmem [resolvable:$true] %s900
          %906 = dma.vmem_to_hbm [thread:$0]  %s901, 1024, %s899, %s887, 128, 128, 8
        $region76: #{tpu_custom_call.1} parent=43 // pred_fallthru
          _
      $region44: #{tpu_custom_call.1} parent=5 // pred_fallthru
        _
      %p907 = scmp.le.s32.totalorder 2, %s20
      // Predicated region
      $region77: #{tpu_custom_call.1} parent=5 // pred_check
        %p908 = pneg %p907
      $region78: #{tpu_custom_call.1} parent=5 // pred_check_branch
        %910 = sbr.rel (%p908) target = $region80
      $region79: #{tpu_custom_call.1} parent=5 // pred_region
        %s911 = ssub.s32 %s20, 2
        // Predicated region
        $region81: #{tpu_custom_call.1} parent=79 // pred_check
          %p912 = pneg %p204
        $region82: #{tpu_custom_call.1} parent=79 // pred_check_branch
          %914 = sbr.rel (%p912) target = $region84
        $region83: #{tpu_custom_call.1} parent=79 // pred_region
          %s915 = sand.u32 %s189, 1
          %s916 = scalar_lea.sflag [#allocation6], %s915
          %s917 = sand.u32 %s189, 1
          %s918 = smul.addr %s917, 64
          %s919 = scalar_lea.vmem [#allocation13], %s918
          %920 = dma.done %s916, 1024
        $region84: #{tpu_custom_call.1} parent=79 // pred_fallthru
          _
      $region80: #{tpu_custom_call.1} parent=5 // pred_fallthru
        _
    $region6: #{tpu_custom_call.1} parent=1 // loop_footer
      %s24 = sadd.s32 1, %s20
    $region7: #{tpu_custom_call.1} parent=1 // loop_footer_branch
      %19 = sbr.rel target = $region3
    $region8: #{tpu_custom_call.1} parent=1 // loop_exit
      _
    %921 = vsyncpa [#allocation5], 1
    %s922 = scalar_lea.sflag [#allocation5], 1
    %923 = vsyncpa %s922, 1
    %924 = vsyncpa [#allocation8], 1
    %925 = vsyncpa [#allocation12], 1
    %926 = vsyncpa [#allocation6], 1
    %s927 = scalar_lea.sflag [#allocation6], 1
    %928 = vsyncpa %s927, 1

</llo_original>
